<compile_context>
chip_gen: v7x
topology: tpu7x:2x2x1
jax: 0.10.0
libtpu: 0.0.40
codegen_flags: <defaults>
</compile_context>

<pallas_src>
import math
import functools

import jax
import jax.numpy as jnp
from jax.experimental import pallas as pl
from jax.experimental.pallas import tpu as pltpu


_VMEM_TILE_BUDGET = 24 * 1024 * 1024   # bytes of live block buffers (conservative)
_VMEM_LIMIT = 64 * 1024 * 1024         # scoped VMEM limit hint (<= v7x physical)


def _pick_tm(rows, lane, n_streams, itemsize):
    """Largest row-tile (multiple of 8, <=1024) whose double-buffered blocks fit."""
    per_row = n_streams * 2 * lane * itemsize          # n streams x 2 buffers
    cap = max(8, (_VMEM_TILE_BUDGET // max(per_row, 1)) // 8 * 8)
    cap = min(cap, 1024)
    if rows <= cap:
        return rows        # full extent -> always a legal block shape
    return cap             # multiple of 8; pl.cdiv grid handles the tail


def _lane_fold(arrs, rows, d):
    """Reshape elementwise operands so the last (lane) dim is a multiple of 128."""
    if d % 128 == 0:
        return arrs, (rows, d)
    total = rows * d
    for lane in (512, 256, 128):
        if total % lane == 0:
            shaped = tuple(a.reshape(total // lane, lane) for a in arrs)
            return shaped, (total // lane, lane)
    return arrs, (rows, d)  # fallback: keep original layout (masked stores)


# ------------------------------------------------------------------ LayerNorm
def _layernorm_kernel(x_ref, a_ref, b_ref, o_ref, *, eps):
    x = x_ref[...].astype(jnp.float32)                       # (tm, D)
    d = x.shape[-1]
    mean = jnp.mean(x, axis=-1, keepdims=True)
    diff = x - mean
    # torch.std default is the UNBIASED estimator (ddof=1); eps is added to std
    var = jnp.sum(diff * diff, axis=-1, keepdims=True) * (1.0 / (d - 1))
    inv = 1.0 / (jnp.sqrt(var) + eps)
    y = a_ref[...] * (diff * inv) + b_ref[...]
    o_ref[...] = y.astype(o_ref.dtype)


def layer_norm_pallas(x2, a_2, b_2, eps=1e-6):
    rows, d = x2.shape
    itemsize = jnp.dtype(x2.dtype).itemsize
    tm = _pick_tm(rows, d, n_streams=2, itemsize=itemsize)   # x in + y out
    a2 = a_2.reshape(1, d).astype(jnp.float32)
    b2 = b_2.reshape(1, d).astype(jnp.float32)
    return pl.pallas_call(
        functools.partial(_layernorm_kernel, eps=eps),
        out_shape=jax.ShapeDtypeStruct((rows, d), x2.dtype),
        grid=(pl.cdiv(rows, tm),),
        in_specs=[
            pl.BlockSpec((tm, d), lambda i: (i, 0)),
            pl.BlockSpec((1, d), lambda i: (0, 0)),
            pl.BlockSpec((1, d), lambda i: (0, 0)),
        ],
        out_specs=pl.BlockSpec((tm, d), lambda i: (i, 0)),
        compiler_params=pltpu.CompilerParams(
            dimension_semantics=("parallel",),
            vmem_limit_bytes=_VMEM_LIMIT,
        ),
    )(x2, a2, b2)


# -------------------------------------------------- residual add (+ dropout)
def _residual_add_kernel(x_ref, y_ref, o_ref):
    o_ref[...] = x_ref[...] + y_ref[...]


def _residual_dropout_kernel(x_ref, y_ref, m_ref, o_ref):
    # m is the precomputed inverted-dropout scale mask: keep ? 1/(1-p) : 0
    o_ref[...] = x_ref[...] + y_ref[...] * m_ref[...]


def _elementwise_call(kernel, arrs, rows, d, dtype, n_streams):
    folded, (r2, lane) = _lane_fold(arrs, rows, d)
    itemsize = jnp.dtype(dtype).itemsize
    tm = _pick_tm(r2, lane, n_streams=n_streams, itemsize=itemsize)
    spec = pl.BlockSpec((tm, lane), lambda i: (i, 0))
    out = pl.pallas_call(
        kernel,
        out_shape=jax.ShapeDtypeStruct((r2, lane), dtype),
        grid=(pl.cdiv(r2, tm),),
        in_specs=[spec] * len(folded),
        out_specs=spec,
        compiler_params=pltpu.CompilerParams(
            dimension_semantics=("parallel",),
            vmem_limit_bytes=_VMEM_LIMIT,
        ),
    )(*folded)
    return out.reshape(rows, d)


def residual_add_pallas(x2, y2):
    rows, d = x2.shape
    return _elementwise_call(_residual_add_kernel, (x2, y2), rows, d,
                             x2.dtype, n_streams=3)


def residual_dropout_pallas(x2, y2, scale_mask):
    rows, d = x2.shape
    return _elementwise_call(_residual_dropout_kernel, (x2, y2, scale_mask),
                             rows, d, x2.dtype, n_streams=4)


# ----------------------------------------------------------- SublayerConnection
def sublayer_connection(x, a_2, b_2, sublayer_fn, dropout_p=0.0, seed=0, eps=1e-6):
    """out = x + dropout(sublayer(LayerNorm(x))); norm over last dim."""
    orig_shape = x.shape
    d = orig_shape[-1]
    rows = math.prod(orig_shape[:-1])
    x2 = x.reshape(rows, d)

    normed = layer_norm_pallas(x2, a_2, b_2, eps=eps)
    # sublayer is an arbitrary callable (applied outside the kernel, like torch)
    # TODO(synk): when sublayer is a known Linear, fuse LN -> matmul -> dropout
    # -> residual into a single Pallas kernel to cut two HBM round trips.
    y = sublayer_fn(normed.reshape(orig_shape)).reshape(rows, d)

    if float(dropout_p) > 0.0:
        # Inverted dropout (training-mode semantics); cannot match torch's RNG
        # stream bit-for-bit.  Mask built with jax.random so the kernel stays
        # free of TPU-only PRNG primitives (no CPU/interpret lowering).
        key = jax.random.PRNGKey(seed)
        keep = jax.random.bernoulli(key, 1.0 - dropout_p, (rows, d))
        scale_mask = jnp.where(keep, 1.0 / (1.0 - dropout_p), 0.0).astype(x2.dtype)
        out = residual_dropout_pallas(x2, y, scale_mask)
    else:
        out = residual_add_pallas(x2, y)
    return out.reshape(orig_shape)


# -------------------------------------------------------------------- reference
def reference(x, a_2, b_2, sublayer_fn, eps=1e-6):
    mean = x.mean(-1, keepdims=True)
    d = x.shape[-1]
    std = jnp.sqrt(((x - mean) ** 2).sum(-1, keepdims=True) / (d - 1))
    n = a_2 * (x - mean) / (std + eps) + b_2
    return x + sublayer_fn(n)   # dropout_p = 0 -> identity


if __name__ == "__main__":
    B, S, D = 2, 8, 32
    key = jax.random.PRNGKey(0)
    kx, kw, kb = jax.random.split(key, 3)

    x = jax.random.normal(kx, (B, S, D), dtype=jnp.float32)

    # LayerNorm params (as in torch __init__: ones / zeros)
    a_2 = jnp.ones((D,), dtype=jnp.float32)
    b_2 = jnp.zeros((D,), dtype=jnp.float32)

    # Deterministic example "sublayer": a simple linear projection.
    W = jax.random.normal(kw, (D, D), dtype=jnp.float32) * 0.05
    bw = jax.random.normal(kb, (D,), dtype=jnp.float32) * 0.05
    sublayer_fn = lambda h: h @ W + bw

    # 1) correctness check with dropout disabled (eval-mode semantics)
    out = sublayer_connection(x, a_2, b_2, sublayer_fn, dropout_p=0.0)
    out = jax.block_until_ready(out)
    ref = reference(x, a_2, b_2, sublayer_fn)
    assert out.shape == x.shape and out.dtype == x.dtype
    assert jnp.allclose(out, ref, atol=1e-5, rtol=1e-5), "mismatch vs reference"

    # 2) exercise the dropout path (training-mode semantics)
    out_drop = sublayer_connection(x, a_2, b_2, sublayer_fn, dropout_p=0.1, seed=42)
    out_drop = jax.block_until_ready(out_drop)
    assert out_drop.shape == x.shape
    assert bool(jnp.all(jnp.isfinite(out_drop)))

    print("KERNEL_OK")
</pallas_src>

<mosaic_0001>
module attributes {stable_mosaic.version = 11 : i64} {
  func.func @_layernorm_kernel(%arg0: i32, %arg1: memref<16x32xf32, #tpu.memory_space<vmem>>, %arg2: memref<1x32xf32, #tpu.memory_space<vmem>>, %arg3: memref<1x32xf32, #tpu.memory_space<vmem>>, %arg4: memref<16x32xf32, #tpu.memory_space<vmem>>) attributes {dimension_semantics = [#tpu.dimension_semantics<parallel>], iteration_bounds = array<i64: 1>, scalar_prefetch = 0 : i64, scratch_operands = 0 : i64, tpu.core_type = #tpu.core_type<tc>, window_params = [{transform_indices = @transform_0, window_bounds = array<i64: 16, 32>}, {pipeline_mode = #tpu.pipeline_mode<synchronous>, transform_indices = @transform_1, window_bounds = array<i64: 1, 32>}, {pipeline_mode = #tpu.pipeline_mode<synchronous>, transform_indices = @transform_2, window_bounds = array<i64: 1, 32>}, {transform_indices = @transform_3, window_bounds = array<i64: 16, 32>}]} {
    %c0 = arith.constant 0 : index
    %c0_0 = arith.constant 0 : index
    %0 = vector.load %arg1[%c0, %c0_0] : memref<16x32xf32, #tpu.memory_space<vmem>>, vector<16x32xf32>
    %cst = arith.constant dense<0.000000e+00> : vector<16xf32>
    %1 = vector.multi_reduction <add>, %0, %cst [1] : vector<16x32xf32> to vector<16xf32>
    %2 = vector.shape_cast %1 : vector<16xf32> to vector<16x1xf32>
    %cst_1 = arith.constant 3.200000e+01 : f32
    %3 = vector.broadcast %cst_1 : f32 to vector<16x1xf32>
    %4 = arith.divf %2, %3 : vector<16x1xf32>
    %5 = vector.broadcast %4 : vector<16x1xf32> to vector<16x32xf32>
    %6 = arith.subf %0, %5 : vector<16x32xf32>
    %7 = arith.mulf %6, %6 : vector<16x32xf32>
    %cst_2 = arith.constant dense<0.000000e+00> : vector<16xf32>
    %8 = vector.multi_reduction <add>, %7, %cst_2 [1] : vector<16x32xf32> to vector<16xf32>
    %9 = vector.shape_cast %8 : vector<16xf32> to vector<16x1xf32>
    %cst_3 = arith.constant 0.0322580636 : f32
    %10 = vector.broadcast %cst_3 : f32 to vector<16x1xf32>
    %11 = arith.mulf %9, %10 : vector<16x1xf32>
    %12 = math.sqrt %11 : vector<16x1xf32>
    %cst_4 = arith.constant 9.99999997E-7 : f32
    %13 = vector.broadcast %cst_4 : f32 to vector<16x1xf32>
    %14 = arith.addf %12, %13 : vector<16x1xf32>
    %cst_5 = arith.constant 1.000000e+00 : f32
    %15 = vector.broadcast %cst_5 : f32 to vector<16x1xf32>
    %16 = arith.divf %15, %14 : vector<16x1xf32>
    %c0_6 = arith.constant 0 : index
    %c0_7 = arith.constant 0 : index
    %17 = vector.load %arg2[%c0_6, %c0_7] : memref<1x32xf32, #tpu.memory_space<vmem>>, vector<1x32xf32>
    %18 = vector.broadcast %16 : vector<16x1xf32> to vector<16x32xf32>
    %19 = arith.mulf %6, %18 : vector<16x32xf32>
    %20 = vector.broadcast %17 : vector<1x32xf32> to vector<16x32xf32>
    %21 = arith.mulf %20, %19 : vector<16x32xf32>
    %c0_8 = arith.constant 0 : index
    %c0_9 = arith.constant 0 : index
    %22 = vector.load %arg3[%c0_8, %c0_9] : memref<1x32xf32, #tpu.memory_space<vmem>>, vector<1x32xf32>
    %23 = vector.broadcast %22 : vector<1x32xf32> to vector<16x32xf32>
    %24 = arith.addf %21, %23 : vector<16x32xf32>
    %c0_10 = arith.constant 0 : index
    %c0_11 = arith.constant 0 : index
    %25 = vector.load %arg4[%c0_10, %c0_11] : memref<16x32xf32, #tpu.memory_space<vmem>>, vector<16x32xf32>
    tpu.vector_store %arg4[%c0_10, %c0_11], %24 {strides = array<i32>} : memref<16x32xf32, #tpu.memory_space<vmem>>, vector<16x32xf32>,
    return
  }
  func.func @transform_0(%arg0: i32) -> (i32, i32) {
    %c0_i32 = arith.constant 0 : i32
    %c0_i32_0 = arith.constant 0 : i32
    return %arg0, %c0_i32 : i32, i32
  }
  func.func @transform_1(%arg0: i32) -> (i32, i32) {
    %c0_i32 = arith.constant 0 : i32
    %c0_i32_0 = arith.constant 0 : i32
    %c0_i32_1 = arith.constant 0 : i32
    return %c0_i32, %c0_i32_0 : i32, i32
  }
  func.func @transform_2(%arg0: i32) -> (i32, i32) {
    %c0_i32 = arith.constant 0 : i32
    %c0_i32_0 = arith.constant 0 : i32
    %c0_i32_1 = arith.constant 0 : i32
    return %c0_i32, %c0_i32_0 : i32, i32
  }
  func.func @transform_3(%arg0: i32) -> (i32, i32) {
    %c0_i32 = arith.constant 0 : i32
    %c0_i32_0 = arith.constant 0 : i32
    return %arg0, %c0_i32 : i32, i32
  }
}

</mosaic_0001>

<llo_original>
// kernel: tpu_custom_call.1
$region0: #{tpu_custom_call.1}
  #allocation0 [shape = 'u32[]', space=smem, size = 0x4, offset = 0x4, fixed_abs, tag = 'smem constant byte address 0x4 - core index']
  #allocation1 [shape = 'u32[144,128]{1,0:T(1,128)}', space=vmem, size = 0x12000, scoped, tag = 'internal scratch']
  %s0 = inlined_call_operand.hbm [shape: f32[16,32], index: 0, kind: input, shape index: {}]
  %s1 = inlined_call_operand.hbm [shape: f32[1,32], index: 1, kind: input, shape index: {}]
  %s2 = inlined_call_operand.hbm [shape: f32[1,32], index: 2, kind: input, shape index: {}]
  %s3 = inlined_call_operand.hbm [shape: f32[16,32], index: 3, kind: output, shape index: {}]
  %s4 = sld [smem:[#allocation0]]
  $region34: #{tpu_custom_call.1} parent=0
    _
  %s6 = ssub.s32 1, %s4
  %s7 = scalar_select 0, %s6, %s4
  $region1: #{tpu_custom_call.1} parent=0
    #allocation2 [shape = 'u8[8192]{0}', space=vmem, size = 0x2000, scoped, tag = 'input window, operand 0, single buffered']
    #allocation3 [shape = 's32[1]{0}', space=sflag, size = 0x4, scoped, tag = 'scoped memory for tpu_custom_call.1']
    #allocation4 [shape = 's32[1]{0}', space=sflag, size = 0x4, scoped, tag = 'scoped memory for tpu_custom_call.1']
    #allocation5 [shape = 'u8[512]{0}', space=vmem, size = 0x400, scoped, tag = 'input window, operand 1, single buffered']
    #allocation6 [shape = 's32[1]{0}', space=sflag, size = 0x4, scoped, tag = 'scoped memory for tpu_custom_call.1']
    #allocation7 [shape = 'u8[512]{0}', space=vmem, size = 0x400, scoped, tag = 'input window, operand 2, single buffered']
    #allocation8 [shape = 'u8[8192]{0}', space=vmem, size = 0x2000, scoped, tag = 'output window, operand 0, single buffered']
    %8 = vsyncpa [#allocation3], 0
    %9 = vsyncpa [#allocation6], 0
    %10 = vsyncpa [#allocation4], 0
    // Predicated region
    $region2: #{tpu_custom_call.1} parent=1 // pred_check
      _
    $region3: #{tpu_custom_call.1} parent=1 // pred_check_branch
      %12 = sbr.rel (0) target = $region5
    $region4: #{tpu_custom_call.1} parent=1 // pred_region
      %s14 = ssub.s32 256, 256
      %15 = vsyncadd [#allocation3], %s14
      %s16 = sshll.u32 [#allocation2], 4
      %s17 = int_to_ptr.vmem [resolvable:$true] %s16
      %22 = dma.hbm_to_vmem [thread:$0]  %s0, 256, %s17, [#allocation3], 128, 128, 8
    $region5: #{tpu_custom_call.1} parent=1 // pred_fallthru
      _
    // Predicated region
    $region6: #{tpu_custom_call.1} parent=1 // pred_check
      _
    $region7: #{tpu_custom_call.1} parent=1 // pred_check_branch
      %24 = sbr.rel (0) target = $region9
    $region8: #{tpu_custom_call.1} parent=1 // pred_region
      %s26 = ssub.s32 16, 16
      %27 = vsyncadd [#allocation6], %s26
      %s29 = sshll.u32 [#allocation5], 4
      %s30 = int_to_ptr.vmem [resolvable:$true] %s29
      %32 = dma.hbm_to_vmem [thread:$0]  %s1, 16, %s30, [#allocation6]
    $region9: #{tpu_custom_call.1} parent=1 // pred_fallthru
      _
    // Predicated region
    $region10: #{tpu_custom_call.1} parent=1 // pred_check
      _
    $region11: #{tpu_custom_call.1} parent=1 // pred_check_branch
      %34 = sbr.rel (0) target = $region13
    $region12: #{tpu_custom_call.1} parent=1 // pred_region
      %s36 = ssub.s32 16, 16
      %37 = vsyncadd [#allocation6], %s36
      %s39 = sshll.u32 [#allocation7], 4
      %s40 = int_to_ptr.vmem [resolvable:$true] %s39
      %42 = dma.hbm_to_vmem [thread:$0]  %s2, 16, %s40, [#allocation6]
    $region13: #{tpu_custom_call.1} parent=1 // pred_fallthru
      _
    // Predicated region
    $region14: #{tpu_custom_call.1} parent=1 // pred_check
      _
    $region15: #{tpu_custom_call.1} parent=1 // pred_check_branch
      %44 = sbr.rel (0) target = $region17
    $region16: #{tpu_custom_call.1} parent=1 // pred_region
      %45 = dma.done [#allocation3], 256
    $region17: #{tpu_custom_call.1} parent=1 // pred_fallthru
      _
    // Predicated region
    $region18: #{tpu_custom_call.1} parent=1 // pred_check
      _
    $region19: #{tpu_custom_call.1} parent=1 // pred_check_branch
      %47 = sbr.rel (0) target = $region21
    $region20: #{tpu_custom_call.1} parent=1 // pred_region
      %48 = dma.done [#allocation6], 16
    $region21: #{tpu_custom_call.1} parent=1 // pred_fallthru
      _
    // Predicated region
    $region22: #{tpu_custom_call.1} parent=1 // pred_check
      _
    $region23: #{tpu_custom_call.1} parent=1 // pred_check_branch
      %50 = sbr.rel (0) target = $region25
    $region24: #{tpu_custom_call.1} parent=1 // pred_region
      %51 = dma.done [#allocation6], 16
    $region25: #{tpu_custom_call.1} parent=1 // pred_fallthru
      _
    %v52 = vld [vmem:[#allocation2] sm:$0xff]
    %v53 = vld [vmem:[#allocation2 + $0x8] sm:$0xff]
    %vm54 = vcmask 261120
    %v55 = vsel %vm54, %v52, 0.0
    %56 = vadd.xlane.f32.xlu0 %v55
    %v57 = vpop.xlane.xlu0 %56
    %v58 = vsel %vm54, %v53, 0.0
    %59 = vadd.xlane.f32.xlu0 %v58
    %v60 = vpop.xlane.xlu0 %59
    %v61 = vrcp.pop 32.0
    %v62 = vmul.f32 %v57, %v61
    %v63 = vmul.f32 %v60, %v61
    %v64 = vsub.f32 %v52, %v62
    %v65 = vsub.f32 %v53, %v63
    %v66 = vmul.f32 %v64, %v64
    %v67 = vmul.f32 %v65, %v65
    %v68 = vsel %vm54, %v66, 0.0
    %69 = vadd.xlane.f32.xlu0 %v68
    %v70 = vpop.xlane.xlu0 %69
    %v71 = vsel %vm54, %v67, 0.0
    %72 = vadd.xlane.f32.xlu0 %v71
    %v73 = vpop.xlane.xlu0 %72
    %v74 = vmul.f32 %v70, 0.032258064
    %v75 = vmul.f32 %v73, 0.032258064
    %v76 = vrsqrt.pop %v74
    %v77 = vmul.f32 %v74, %v76
    %vm78 = vcmp.eq.f32.partialorder %v74, inf
    %v79 = vsel %vm78, %v74, %v77
    %vm80 = vcmp.eq.f32.partialorder %v74, 0.0
    %v81 = vand.u32 %v74, 2147483648
    %v82 = vsel %vm80, %v81, %v79
    %v83 = vrsqrt.pop %v75
    %v84 = vmul.f32 %v75, %v83
    %vm85 = vcmp.eq.f32.partialorder %v75, inf
    %v86 = vsel %vm85, %v75, %v84
    %vm87 = vcmp.eq.f32.partialorder %v75, 0.0
    %v88 = vand.u32 %v75, 2147483648
    %v89 = vsel %vm87, %v88, %v86
    %v90 = vadd.f32 %v82, 1e-06
    %v91 = vadd.f32 %v89, 1e-06
    %v92 = vrcp.pop %v90
    %v93 = vmul.f32 1.0, %v92
    %v94 = vrcp.pop %v91
    %v95 = vmul.f32 1.0, %v94
    %v96 = vld [vmem:[#allocation5] sm:$0x1]
    %v97 = vmul.f32 %v64, %v93
    %v98 = vmul.f32 %v65, %v95
    %v100 = vlaneseq
    %v101 = vshrl.u32 %v100, 7
    %v102 = vsub.s32 0, %v101
    %v103 = vrot.slane %v96, %v102
    %v105 = vmul.f32 %v103, %v97
    %v106 = vmul.f32 %v103, %v98
    %v107 = vld [vmem:[#allocation7] sm:$0x1]
    %v109 = vlaneseq
    %v110 = vshrl.u32 %v109, 7
    %v111 = vsub.s32 0, %v110
    %v112 = vrot.slane %v107, %v111
    %v114 = vadd.f32 %v105, %v112
    %v115 = vadd.f32 %v106, %v112
    %116 = vst.msk [vmem:[#allocation8] sm:$0xff] %vm54, %v114
    %117 = vst.msk [vmem:[#allocation8 + $0x8] sm:$0xff] %vm54, %v115
    // Predicated region
    $region26: #{tpu_custom_call.1} parent=1 // pred_check
      _
    $region27: #{tpu_custom_call.1} parent=1 // pred_check_branch
      %119 = sbr.rel (0) target = $region29
    $region28: #{tpu_custom_call.1} parent=1 // pred_region
      %s121 = ssub.s32 256, 256
      %122 = vsyncadd [#allocation4], %s121
      %s123 = sshll.u32 [#allocation8], 4
      %s124 = int_to_ptr.vmem [resolvable:$true] %s123
      %129 = dma.vmem_to_hbm [thread:$0]  %s124, 256, %s3, [#allocation4], 128, 128, 8
    $region29: #{tpu_custom_call.1} parent=1 // pred_fallthru
      _
    // Predicated region
    $region30: #{tpu_custom_call.1} parent=1 // pred_check
      _
    $region31: #{tpu_custom_call.1} parent=1 // pred_check_branch
      %131 = sbr.rel (0) target = $region33
    $region32: #{tpu_custom_call.1} parent=1 // pred_region
      %132 = dma.done [#allocation4], 256
    $region33: #{tpu_custom_call.1} parent=1 // pred_fallthru
      _
    %133 = vsyncpa [#allocation3], 1
    %134 = vsyncpa [#allocation6], 1
    %135 = vsyncpa [#allocation4], 1

</llo_original>
